<compile_context>
chip_gen: v6e
topology: v6e:2x2x1
jax: 0.10.0
libtpu: 0.0.40
codegen_flags: <defaults>
</compile_context>

<pallas_src>
import functools
from typing import NamedTuple, Optional

import jax
import jax.numpy as jnp
from jax.experimental import pallas as pl
from jax.experimental.pallas import tpu as pltpu

LANE = 128


def _round_up(x: int, m: int) -> int:
    return ((x + m - 1) // m) * m


def _sublane_multiple(dtype) -> int:
    # f32 -> 8, bf16 -> 16, int8/fp8 -> 32
    return max(8, 32 // jnp.dtype(dtype).itemsize)


def _largest_tile(dim: int, align: int, cap: int) -> int:
    """Largest divisor of `dim` that is a multiple of `align` and <= cap.
    `dim` must itself be a multiple of `align` (so `align` is a valid fallback)."""
    best = align
    t = align
    limit = min(cap, dim)
    while t <= limit:
        if dim % t == 0:
            best = t
        t += align
    return best


def _vmem_limit_bytes() -> int:
    """Generation-aware scoped-VMEM limit (v7x has 64 MiB physical; v5e/v6e 128 MiB)."""
    default_cap = 64 * 1024 * 1024
    try:
        info = pltpu.get_tpu_info()
        cap = getattr(info, "vmem_capacity_bytes", None) or default_cap
    except Exception:
        cap = default_cap
    return int(max(32 * 1024 * 1024, min(cap * 3 // 4, 96 * 1024 * 1024)))


# ----------------------------- kernel bodies ------------------------------ #

def _epilogue(acc, b_ref, act_thres, activation):
    if b_ref is not None:
        acc = acc + b_ref[...]                     # [1, tn] broadcast over rows
    if activation:
        acc = jnp.minimum(jnp.maximum(acc, 0.0), jnp.float32(act_thres))
    return acc


def _single_block_kernel(*refs, act_thres, activation, use_bias):
    if use_bias:
        x_ref, w_ref, b_ref, o_ref = refs
    else:
        x_ref, w_ref, o_ref = refs
        b_ref = None
    acc = jnp.dot(x_ref[...], w_ref[...], preferred_element_type=jnp.float32)
    acc = _epilogue(acc, b_ref, act_thres, activation)
    o_ref[...] = acc.astype(o_ref.dtype)


def _tiled_kernel_f32out(*refs, act_thres, activation, use_bias):
    # Output dtype is f32: accumulate straight into the k-resident output block.
    if use_bias:
        x_ref, w_ref, b_ref, o_ref = refs
    else:
        x_ref, w_ref, o_ref = refs
        b_ref = None
    k = pl.program_id(2)

    @pl.when(k == 0)
    def _():
        o_ref[...] = jnp.zeros_like(o_ref)

    o_ref[...] += jnp.dot(x_ref[...], w_ref[...], preferred_element_type=jnp.float32)

    @pl.when(k == pl.num_programs(2) - 1)
    def _():
        o_ref[...] = _epilogue(o_ref[...], b_ref, act_thres, activation)


def _tiled_kernel_scratch(*refs, act_thres, activation, use_bias):
    # Non-f32 output dtype: f32 VMEM accumulator, cast on the last K step.
    if use_bias:
        x_ref, w_ref, b_ref, o_ref, acc_ref = refs
    else:
        x_ref, w_ref, o_ref, acc_ref = refs
        b_ref = None
    k = pl.program_id(2)

    @pl.when(k == 0)
    def _():
        acc_ref[...] = jnp.zeros_like(acc_ref)

    acc_ref[...] += jnp.dot(x_ref[...], w_ref[...], preferred_element_type=jnp.float32)

    @pl.when(k == pl.num_programs(2) - 1)
    def _():
        acc = _epilogue(acc_ref[...], b_ref, act_thres, activation)
        o_ref[...] = acc.astype(o_ref.dtype)


# ------------------------------- wrappers ---------------------------------- #

class LinearBlockParams(NamedTuple):
    weight_t_padded: jax.Array            # [Kp, Np], pre-transposed + pre-padded
    bias_padded: Optional[jax.Array]       # [1, Np] f32, or None
    in_channel: int
    out_channel: int


def init_linear_block(weight, bias=None, compute_dtype=None) -> LinearBlockParams:
    """One-time setup. `weight` is in PyTorch nn.Linear layout [Cout, Cin].
    Transpose + zero-pad to lane-dense (Kp, Np) once, not per forward.
    Optionally cast weights to `compute_dtype` (e.g. bf16 for the fast MXU path)."""
    w = jnp.asarray(weight)
    if compute_dtype is not None:
        w = w.astype(compute_dtype)
    Cout, Cin = w.shape
    Kp, Np = _round_up(Cin, LANE), _round_up(Cout, LANE)
    wt = w.T                                              # [Cin, Cout]
    if (Kp, Np) != (Cin, Cout):
        wt = jnp.pad(wt, ((0, Kp - Cin), (0, Np - Cout)))
    bp = None
    if bias is not None:
        b = jnp.asarray(bias, jnp.float32)
        if Np != Cout:
            b = jnp.pad(b, (0, Np - Cout))
        bp = b.reshape(1, Np)
    return LinearBlockParams(wt, bp, Cin, Cout)


def linear_block_forward(x, params: LinearBlockParams, act_thres=6, activation=True):
    """x: [B, Cin]. Returns clamp(x @ W^T (+ b), 0, act_thres) (clamp iff activation)."""
    M, K = x.shape
    assert K == params.in_channel, "x last dim must equal in_channel"
    N = params.out_channel
    Kp, Np = params.weight_t_padded.shape
    use_bias = params.bias_padded is not None
    out_dtype = x.dtype

    # Optional bf16/other compute path: match the cached weight dtype.
    compute_dtype = params.weight_t_padded.dtype
    if x.dtype != compute_dtype:
        x = x.astype(compute_dtype)

    sub = _sublane_multiple(compute_dtype)
    Mp = _round_up(M, sub)
    xp = x if (Mp == M and Kp == K) else jnp.pad(x, ((0, Mp - M), (0, Kp - K)))

    TM_CAP = TN_CAP = 512
    TK_CAP = 1024
    vmem_limit = _vmem_limit_bytes()

    # ---------------- single-block fast path (small layers) ---------------- #
    if Mp <= TM_CAP and Np <= TN_CAP and Kp <= TK_CAP:
        in_specs = [pl.BlockSpec((Mp, Kp), lambda: (0, 0)),
                    pl.BlockSpec((Kp, Np), lambda: (0, 0))]
        operands = [xp, params.weight_t_padded]
        if use_bias:
            operands.append(params.bias_padded)
            in_specs.append(pl.BlockSpec((1, Np), lambda: (0, 0)))
        kernel = functools.partial(_single_block_kernel, act_thres=act_thres,
                                   activation=activation, use_bias=use_bias)
        yp = pl.pallas_call(
            kernel,
            out_shape=jax.ShapeDtypeStruct((Mp, Np), out_dtype),
            in_specs=in_specs,
            out_specs=pl.BlockSpec((Mp, Np), lambda: (0, 0)),
            compiler_params=pltpu.CompilerParams(vmem_limit_bytes=vmem_limit),
        )(*operands)
        if Mp != M or Np != N:
            yp = yp[:M, :N]
        return yp

    # ----------------------------- tiled path ------------------------------ #
    # Tiles are divisors of the (already aligned) padded dims -> zero extra padding.
    tm = _largest_tile(Mp, sub, TM_CAP)
    tn = _largest_tile(Np, LANE, TN_CAP)
    tk = _largest_tile(Kp, LANE, TK_CAP)
    gi, gj, gk = Mp // tm, Np // tn, Kp // tk

    # Megacore shaping (v7x has 2 TCs): make sure the parallel (i,j) grid has >=2 blocks.
    if gi * gj == 1 and Mp >= 2 * sub:
        tm = _largest_tile(Mp, sub, max(sub, Mp // 2))
        gi = Mp // tm

    in_specs = [
        pl.BlockSpec((tm, tk), lambda i, j, k: (i, k)),   # x tile
        pl.BlockSpec((tk, tn), lambda i, j, k: (k, j)),   # W^T tile
    ]
    operands = [xp, params.weight_t_padded]
    if use_bias:
        operands.append(params.bias_padded)
        in_specs.append(pl.BlockSpec((1, tn), lambda i, j, k: (0, j)))

    out_is_f32 = jnp.dtype(out_dtype) == jnp.dtype(jnp.float32)
    if out_is_f32:
        kernel = functools.partial(_tiled_kernel_f32out, act_thres=act_thres,
                                   activation=activation, use_bias=use_bias)
        scratch_shapes = []
    else:
        kernel = functools.partial(_tiled_kernel_scratch, act_thres=act_thres,
                                   activation=activation, use_bias=use_bias)
        scratch_shapes = [pltpu.VMEM((tm, tn), jnp.float32)]

    x_bytes = jnp.dtype(compute_dtype).itemsize
    o_bytes = jnp.dtype(out_dtype).itemsize
    cost = pl.CostEstimate(
        flops=2 * Mp * Kp * Np,
        transcendentals=0,
        bytes_accessed=(Mp * Kp * x_bytes * gj        # x re-read per N tile
                        + Kp * Np * x_bytes * gi      # W re-read per M tile
                        + Mp * Np * o_bytes),         # output written once
    )

    yp = pl.pallas_call(
        kernel,
        out_shape=jax.ShapeDtypeStruct((Mp, Np), out_dtype),
        grid=(gi, gj, gk),
        in_specs=in_specs,
        out_specs=pl.BlockSpec((tm, tn), lambda i, j, k: (i, j)),
        scratch_shapes=scratch_shapes,
        compiler_params=pltpu.CompilerParams(
            dimension_semantics=("parallel", "parallel", "arbitrary"),
            vmem_limit_bytes=vmem_limit),
        cost_estimate=cost,
    )(*operands)

    if Mp != M or Np != N:
        yp = yp[:M, :N]
    return yp


if __name__ == "__main__":
    # Module defaults: bias=False, activation=True, act_thres=6, miniblock=8
    # (channels divisible by miniblock, as the blocked linear expects).
    batch = 8
    in_channel = 32
    out_channel = 16

    key = jax.random.PRNGKey(0)
    kx, kw, kb = jax.random.split(key, 3)
    x = jax.random.normal(kx, (batch, in_channel), dtype=jnp.float32) * 2.0
    # Deterministic synthetic weight init (Kaiming-ish scale), PyTorch [out, in] layout.
    weight = jax.random.normal(kw, (out_channel, in_channel), dtype=jnp.float32) * (
        1.0 / jnp.sqrt(in_channel))

    # Transpose + pad cached ONCE at init (not per forward call).
    params = init_linear_block(weight, bias=None)

    # Small-shape forward -> exercises the single-block fast path.
    y = linear_block_forward(x, params, act_thres=6, activation=True)
    y = jax.block_until_ready(y)
    y_ref = jnp.clip(x @ weight.T, 0.0, 6.0)
    assert y.shape == (batch, out_channel)
    assert jnp.allclose(y, y_ref, atol=1e-5, rtol=1e-5)

    # Larger shape (M > 512) with bias -> exercises the tiled K-accumulation path.
    M2, Cin2, Cout2 = 640, 256, 192
    k2x, k2w, k2b = jax.random.split(jax.random.PRNGKey(1), 3)
    x2 = jax.random.normal(k2x, (M2, Cin2), dtype=jnp.float32)
    w2 = jax.random.normal(k2w, (Cout2, Cin2), dtype=jnp.float32) * (1.0 / jnp.sqrt(Cin2))
    b2 = jax.random.normal(k2b, (Cout2,), dtype=jnp.float32) * 0.1
    params2 = init_linear_block(w2, bias=b2)
    y2 = jax.block_until_ready(
        linear_block_forward(x2, params2, act_thres=6, activation=True))
    y2_ref = jnp.clip(x2 @ w2.T + b2, 0.0, 6.0)
    assert y2.shape == (M2, Cout2)
    assert jnp.allclose(y2, y2_ref, atol=1e-4, rtol=1e-4)

    print("KERNEL_OK")
</pallas_src>

<mosaic_0001>
module attributes {stable_mosaic.version = 11 : i64} {
  func.func @_single_block_kernel(%arg0: memref<8x128xf32, #tpu.memory_space<vmem>>, %arg1: memref<128x128xf32, #tpu.memory_space<vmem>>, %arg2: memref<8x128xf32, #tpu.memory_space<vmem>>) attributes {dimension_semantics = [], scalar_prefetch = 0 : i64, scratch_operands = 0 : i64, tpu.core_type = #tpu.core_type<tc>} {
    %c0 = arith.constant 0 : index
    %c0_0 = arith.constant 0 : index
    %0 = vector.load %arg0[%c0, %c0_0] : memref<8x128xf32, #tpu.memory_space<vmem>>, vector<8x128xf32>
    %c0_1 = arith.constant 0 : index
    %c0_2 = arith.constant 0 : index
    %1 = vector.load %arg1[%c0_1, %c0_2] : memref<128x128xf32, #tpu.memory_space<vmem>>, vector<128x128xf32>
    %cst = arith.constant dense<0.000000e+00> : vector<8x128xf32>
    %2 = tpu.matmul %0, %1, %cst {dimension_numbers = #tpu.dot_dimension_numbers<[1], [0], [0], [1], [0, 0, 1, 1], [], []>} : vector<8x128xf32>, vector<128x128xf32>, vector<8x128xf32> -> vector<8x128xf32>
    %cst_3 = arith.constant 0.000000e+00 : f32
    %3 = vector.broadcast %cst_3 : f32 to vector<8x128xf32>
    %4 = arith.maximumf %2, %3 : vector<8x128xf32>
    %cst_4 = arith.constant 6.000000e+00 : f32
    %5 = vector.broadcast %cst_4 : f32 to vector<8x128xf32>
    %6 = arith.minimumf %4, %5 : vector<8x128xf32>
    %c0_5 = arith.constant 0 : index
    %c0_6 = arith.constant 0 : index
    %7 = vector.load %arg2[%c0_5, %c0_6] : memref<8x128xf32, #tpu.memory_space<vmem>>, vector<8x128xf32>
    tpu.vector_store %arg2[%c0_5, %c0_6], %6 {strides = array<i32>} : memref<8x128xf32, #tpu.memory_space<vmem>>, vector<8x128xf32>,
    return
  }
}

</mosaic_0001>

<llo_original>
// kernel: tpu_custom_call.1
$region0: #{tpu_custom_call.1}
  #allocation0 [shape = 'u32[]', space=smem, size = 0x4, offset = 0x4, fixed_abs, tag = 'smem constant byte address 0x4 - core index']
  #allocation1 [shape = 'u32[144,128]{1,0:T(1,128)}', space=vmem, size = 0x12000, scoped, tag = 'internal scratch']
  %s0 = inlined_call_operand.hbm [shape: f32[8,128], index: 0, kind: input, shape index: {}]
  %s1 = inlined_call_operand.hbm [shape: f32[128,128], index: 1, kind: input, shape index: {}]
  %s2 = inlined_call_operand.hbm [shape: f32[8,128], index: 2, kind: output, shape index: {}]
  %s3 = sld [smem:[#allocation0]]
  $region26: #{tpu_custom_call.1} parent=0
    _
  %s5 = ssub.s32 1, %s3
  %s6 = scalar_select 0, %s5, %s3
  $region1: #{tpu_custom_call.1} parent=0
    #allocation2 [shape = 'u8[4096]{0}', space=vmem, size = 0x1000, scoped, tag = 'input window, operand 0, single buffered']
    #allocation3 [shape = 's32[1]{0}', space=sflag, size = 0x4, scoped, tag = 'scoped memory for tpu_custom_call.1']
    #allocation4 [shape = 's32[1]{0}', space=sflag, size = 0x4, scoped, tag = 'scoped memory for tpu_custom_call.1']
    #allocation5 [shape = 'u8[65536]{0}', space=vmem, size = 0x10000, scoped, tag = 'input window, operand 1, single buffered']
    #allocation6 [shape = 's32[1]{0}', space=sflag, size = 0x4, scoped, tag = 'scoped memory for tpu_custom_call.1']
    #allocation7 [shape = 'u8[4096]{0}', space=vmem, size = 0x1000, scoped, tag = 'output window, operand 0, single buffered']
    %7 = vsyncpa [#allocation3], 0
    %8 = vsyncpa [#allocation6], 0
    %9 = vsyncpa [#allocation4], 0
    // Predicated region
    $region2: #{tpu_custom_call.1} parent=1 // pred_check
      _
    $region3: #{tpu_custom_call.1} parent=1 // pred_check_branch
      %11 = sbr.rel (0) target = $region5
    $region4: #{tpu_custom_call.1} parent=1 // pred_region
      %s13 = ssub.s32 128, 128
      %14 = vsyncadd [#allocation3], %s13
      %s16 = sshll.u32 [#allocation2], 4
      %s17 = int_to_ptr.vmem [resolvable:$true] %s16
      %19 = dma.hbm_to_vmem [thread:$0]  %s0, 128, %s17, [#allocation3]
    $region5: #{tpu_custom_call.1} parent=1 // pred_fallthru
      _
    // Predicated region
    $region6: #{tpu_custom_call.1} parent=1 // pred_check
      _
    $region7: #{tpu_custom_call.1} parent=1 // pred_check_branch
      %21 = sbr.rel (0) target = $region9
    $region8: #{tpu_custom_call.1} parent=1 // pred_region
      %s23 = ssub.s32 2048, 2048
      %24 = vsyncadd [#allocation6], %s23
      %s25 = sshll.u32 [#allocation5], 4
      %s26 = int_to_ptr.vmem [resolvable:$true] %s25
      %31 = dma.hbm_to_vmem [thread:$0]  %s1, 2048, %s26, [#allocation6], 128, 128, 8
    $region9: #{tpu_custom_call.1} parent=1 // pred_fallthru
      _
    // Predicated region
    $region10: #{tpu_custom_call.1} parent=1 // pred_check
      _
    $region11: #{tpu_custom_call.1} parent=1 // pred_check_branch
      %33 = sbr.rel (0) target = $region13
    $region12: #{tpu_custom_call.1} parent=1 // pred_region
      %34 = dma.done [#allocation3], 128
    $region13: #{tpu_custom_call.1} parent=1 // pred_fallthru
      _
    // Predicated region
    $region14: #{tpu_custom_call.1} parent=1 // pred_check
      _
    $region15: #{tpu_custom_call.1} parent=1 // pred_check_branch
      %36 = sbr.rel (0) target = $region17
    $region16: #{tpu_custom_call.1} parent=1 // pred_region
      %37 = dma.done [#allocation6], 2048
    $region17: #{tpu_custom_call.1} parent=1 // pred_fallthru
      _
    %v38 = vld [vmem:[#allocation2] sm:$0xff]
    %v39 = vld [vmem:[#allocation5] sm:$0xff]
    %v40 = vld [vmem:[#allocation5 + $0x8] sm:$0xff]
    %v41 = vld [vmem:[#allocation5 + $0x10] sm:$0xff]
    %v42 = vld [vmem:[#allocation5 + $0x18] sm:$0xff]
    %v43 = vld [vmem:[#allocation5 + $0x20] sm:$0xff]
    %v44 = vld [vmem:[#allocation5 + $0x28] sm:$0xff]
    %v45 = vld [vmem:[#allocation5 + $0x30] sm:$0xff]
    %v46 = vld [vmem:[#allocation5 + $0x38] sm:$0xff]
    %v47 = vld [vmem:[#allocation5 + $0x40] sm:$0xff]
    %v48 = vld [vmem:[#allocation5 + $0x48] sm:$0xff]
    %v49 = vld [vmem:[#allocation5 + $0x50] sm:$0xff]
    %v50 = vld [vmem:[#allocation5 + $0x58] sm:$0xff]
    %v51 = vld [vmem:[#allocation5 + $0x60] sm:$0xff]
    %v52 = vld [vmem:[#allocation5 + $0x68] sm:$0xff]
    %v53 = vld [vmem:[#allocation5 + $0x70] sm:$0xff]
    %v54 = vld [vmem:[#allocation5 + $0x78] sm:$0xff]
    %55 = vmatprep.subr.mxu0 0.0
    %56 = vmatpush1.msra.mxu0 %v54
    %57 = vmatprep.subr.mxu0 0.0
    %58 = vmatpush1.msra.mxu0 %v53
    %59 = vmatprep.subr.mxu0 0.0
    %60 = vmatpush1.msra.mxu0 %v52
    %61 = vmatprep.subr.mxu0 0.0
    %62 = vmatpush1.msra.mxu0 %v51
    %63 = vmatprep.subr.mxu0 0.0
    %64 = vmatpush1.msra.mxu0 %v50
    %65 = vmatprep.subr.mxu0 0.0
    %66 = vmatpush1.msra.mxu0 %v49
    %67 = vmatprep.subr.mxu0 0.0
    %68 = vmatpush1.msra.mxu0 %v48
    %69 = vmatprep.subr.mxu0 0.0
    %70 = vmatpush1.msra.mxu0 %v47
    %71 = vmatprep.subr.mxu0 0.0
    %72 = vmatpush1.msra.mxu0 %v46
    %73 = vmatprep.subr.mxu0 0.0
    %74 = vmatpush1.msra.mxu0 %v45
    %75 = vmatprep.subr.mxu0 0.0
    %76 = vmatpush1.msra.mxu0 %v44
    %77 = vmatprep.subr.mxu0 0.0
    %78 = vmatpush1.msra.mxu0 %v43
    %79 = vmatprep.subr.mxu0 0.0
    %80 = vmatpush1.msra.mxu0 %v42
    %81 = vmatprep.subr.mxu0 0.0
    %82 = vmatpush1.msra.mxu0 %v41
    %83 = vmatprep.subr.mxu0 0.0
    %84 = vmatpush1.msra.mxu0 %v40
    %85 = vmatprep.subr.mxu0 0.0
    %86 = vmatpush1.msra.mxu0 %v39
    %87 = vmatprep.subr.mxu0 0.0
    %88 = vmatpush2.msra.mxu0 0.0
    %89 = vmatprep.subr.mxu0 0.0
    %90 = vmatpush2.msra.mxu0 0.0
    %91 = vmatprep.subr.mxu0 0.0
    %92 = vmatpush2.msra.mxu0 0.0
    %93 = vmatprep.subr.mxu0 0.0
    %94 = vmatpush2.msra.mxu0 0.0
    %95 = vmatprep.subr.mxu0 0.0
    %96 = vmatpush2.msra.mxu0 0.0
    %97 = vmatprep.subr.mxu0 0.0
    %98 = vmatpush2.msra.mxu0 0.0
    %99 = vmatprep.subr.mxu0 0.0
    %100 = vmatpush2.msra.mxu0 0.0
    %101 = vmatprep.subr.mxu0 0.0
    %102 = vmatpush2.msra.mxu0 0.0
    %103 = vmatprep.subr.mxu0 0.0
    %104 = vmatpush2.msra.mxu0 0.0
    %105 = vmatprep.subr.mxu0 0.0
    %106 = vmatpush2.msra.mxu0 0.0
    %107 = vmatprep.subr.mxu0 0.0
    %108 = vmatpush2.msra.mxu0 0.0
    %109 = vmatprep.subr.mxu0 0.0
    %110 = vmatpush2.msra.mxu0 0.0
    %111 = vmatprep.subr.mxu0 0.0
    %112 = vmatpush2.msra.mxu0 0.0
    %113 = vmatprep.subr.mxu0 0.0
    %114 = vmatpush2.msra.mxu0 0.0
    %115 = vmatprep.subr.mxu0 0.0
    %116 = vmatpush2.msra.mxu0 0.0
    %117 = vmatprep.subr.mxu0 0.0
    %118 = vmatpush2.msra.mxu0 0.0
    %119 = vmatprep.mubr.f32.mxu0 0.0
    %120 = vmatmul.mubr.f32.gmra.mxu0 %v38
    %v121 = vpop.f32.mrf.mxu0
    %v122 = vadd.f32 0.0, %v121
    %v123 = vpop.f32.mrf.mxu0
    %124 = vdwg.mxu0
    %v125 = vmax.f32 %v122, 0.0
    %v126 = vmin.f32 %v125, 6.0
    %127 = vst [vmem:[#allocation7] sm:$0xff] %v126
    // Predicated region
    $region18: #{tpu_custom_call.1} parent=1 // pred_check
      _
    $region19: #{tpu_custom_call.1} parent=1 // pred_check_branch
      %129 = sbr.rel (0) target = $region21
    $region20: #{tpu_custom_call.1} parent=1 // pred_region
      %s131 = ssub.s32 128, 128
      %132 = vsyncadd [#allocation4], %s131
      %s134 = sshll.u32 [#allocation7], 4
      %s135 = int_to_ptr.vmem [resolvable:$true] %s134
      %137 = dma.vmem_to_hbm [thread:$0]  %s135, 128, %s2, [#allocation4]
    $region21: #{tpu_custom_call.1} parent=1 // pred_fallthru
      _
    // Predicated region
    $region22: #{tpu_custom_call.1} parent=1 // pred_check
      _
    $region23: #{tpu_custom_call.1} parent=1 // pred_check_branch
      %139 = sbr.rel (0) target = $region25
    $region24: #{tpu_custom_call.1} parent=1 // pred_region
      %140 = dma.done [#allocation4], 128
    $region25: #{tpu_custom_call.1} parent=1 // pred_fallthru
      _
    %141 = vsyncpa [#allocation3], 1
    %142 = vsyncpa [#allocation6], 1
    %143 = vsyncpa [#allocation4], 1

</llo_original>
